<compile_context>
chip_gen: v7x
topology: tpu7x:2x2x1
jax: 0.10.0
libtpu: 0.0.40
codegen_flags: <defaults>
</compile_context>

<pallas_src>
import functools

import jax
import jax.numpy as jnp
from jax.experimental import pallas as pl
from jax.experimental.pallas import tpu as pltpu


def _slowdown_kernel(x_ref, o_ref, *, repeat_factor):
    """One grid step: out[t, :] = x[t // repeat_factor, :] within one block.

    x_ref : VMEM (S_blk, tile)  source frames referenced by this block
    o_ref : VMEM (T_blk, tile)  slowed-down output frames

    Pure vld / sublane-broadcast / vst copy.  The Python loop is static and
    fully unrolled (all indices / sizes are compile-time constants).
    """
    t_blk, lanes = o_ref.shape
    r = repeat_factor
    t, s = 0, 0
    while t < t_blk:
        n_rep = min(r, t_blk - t)
        row = x_ref[pl.ds(s, 1), :]                               # (1, lanes)
        o_ref[pl.ds(t, n_rep), :] = jnp.broadcast_to(row, (n_rep, lanes))
        t += n_rep
        s += 1


def _divisor_tiles(total, quantum):
    """Divisors of `total` that are multiples of `quantum`, descending."""
    cands = [d for d in range(total, 0, -quantum)
             if total % d == 0 and d % quantum == 0]
    return cands or [total]


def video_slow_down(x, repeat_factor=2, *, vmem_budget_bytes=8 * 1024 * 1024):
    """Pallas implementation of VideoSlowDown.forward.

    x : (N, T, V, C) array.  Returns (N, T, V, C) with out[:, t] = x[:, t//r].
    """
    N, T, V, C = x.shape
    r = int(repeat_factor)
    if r <= 1 or T <= 1:
        return x                               # identity — skip the HBM pass

    VC = V * C
    itemsize = jnp.dtype(x.dtype).itemsize
    sub = max(8, 32 // itemsize)               # sublane pack: 8 f32 / 16 bf16 / 32 int8
    unit = r * sub                             # output-time tile quantum

    # ---- lane (last-dim) tiles: multiples of 128 dividing VC, else full VC.
    lane_cands = _divisor_tiles(VC, 128) if VC % 128 == 0 else [VC]

    # ---- output-time tiles: multiples of r*sub dividing T, else full T.
    time_blocked = (T >= unit) and (T % unit == 0)
    time_cands = _divisor_tiles(T, unit) if time_blocked else [T]
    if time_blocked:
        # Bound the number of unrolled copy groups per block (compile size).
        max_groups = 256
        capped = [tt for tt in time_cands if tt <= max(unit, max_groups * r)]
        time_cands = capped or time_cands
    # Note: a very long, non-(r*sub)-aligned T falls back to a single full-T
    # time block and a larger unroll; still correct, just slower to trace.

    def s_blk_for(t_blk):
        if time_blocked:
            return t_blk // r                  # multiple of `sub` by construction
        s_needed = -(-T // r)                  # ceil(T / r)
        return min(T, -(-s_needed // sub) * sub)

    def footprint(tile, t_blk):
        # both blocks, double-buffered by the Pallas pipeline
        return 2 * (s_blk_for(t_blk) + t_blk) * tile * itemsize

    # Widest lane tile + largest time tile fitting the double-buffered budget.
    tile, t_blk = lane_cands[-1], time_cands[-1]
    done = False
    for lt in lane_cands:
        for tt in time_cands:
            if footprint(lt, tt) <= vmem_budget_bytes:
                tile, t_blk = lt, tt
                done = True
                break
        if done:
            break

    # Ensure enough grid steps for v7x megacore: refine time first (keeps the
    # lane width — the bigger measured lever), then lane (never below 256).
    MIN_GRID_STEPS = 8

    def n_steps(lt, tt):
        return N * (VC // lt) * (T // tt)

    if n_steps(tile, t_blk) < MIN_GRID_STEPS:
        for tt in time_cands:                  # descending: coarsest that reaches the target
            if tt <= t_blk and n_steps(tile, tt) >= MIN_GRID_STEPS:
                t_blk = tt
                break
    if n_steps(tile, t_blk) < MIN_GRID_STEPS:
        for lt in lane_cands:
            if lt <= tile and lt >= 256 and n_steps(lt, t_blk) >= MIN_GRID_STEPS:
                tile = lt
                break

    s_blk = s_blk_for(t_blk)
    n_lane = VC // tile
    n_time = T // t_blk

    x3 = x.reshape(N, T, VC)                   # lane-dense view (free reshape)

    cost = pl.CostEstimate(
        flops=0,                               # pure memory op
        transcendentals=0,
        bytes_accessed=(N * n_time * s_blk * VC + N * T * VC) * itemsize,
    )

    grid_spec = pltpu.PrefetchScalarGridSpec(
        num_scalar_prefetch=0,
        grid=(N, n_time, n_lane),
        in_specs=[
            # batch dim squeezed out of the kernel view (None block dim).
            pl.BlockSpec((None, s_blk, tile), lambda n, tb, lb: (n, tb, lb)),
        ],
        out_specs=pl.BlockSpec((None, t_blk, tile), lambda n, tb, lb: (n, tb, lb)),
    )

    vmem_limit = int(min(max(4 * footprint(tile, t_blk), 16 * 1024 * 1024),
                         48 * 1024 * 1024))   # headroom, but safe on v7x (64 MiB)

    out3 = pl.pallas_call(
        functools.partial(_slowdown_kernel, repeat_factor=r),
        out_shape=jax.ShapeDtypeStruct((N, T, VC), x.dtype),
        grid_spec=grid_spec,
        compiler_params=pltpu.CompilerParams(
            dimension_semantics=("parallel", "parallel", "parallel"),
            vmem_limit_bytes=vmem_limit,
        ),
        cost_estimate=cost,
    )(x3)

    return out3.reshape(N, T, V, C)


if __name__ == "__main__":
    key = jax.random.PRNGKey(0)

    # Shapes implied by the module: batch=2, seq=8, spatial(joints)=16,
    # hidden(channels)=32.
    N, T, V, C = 2, 8, 16, 32
    x = jax.random.uniform(key, (N, T, V, C), dtype=jnp.float32)

    out = jax.block_until_ready(video_slow_down(x, repeat_factor=2))
    ref = jnp.repeat(x, 2, axis=1)[:, :T]      # pure-JAX reference of forward
    assert out.shape == (N, T, V, C)
    assert out.dtype == x.dtype
    assert jnp.array_equal(out, ref)           # exact copy — bit-exact check

    # Second small config exercising the time-blocked grid path.
    N2, T2, V2, C2 = 2, 32, 16, 8
    x2 = jax.random.uniform(jax.random.PRNGKey(0), (N2, T2, V2, C2),
                            dtype=jnp.float32)
    out2 = jax.block_until_ready(video_slow_down(x2, repeat_factor=2))
    ref2 = jnp.repeat(x2, 2, axis=1)[:, :T2]
    assert jnp.array_equal(out2, ref2)

    print("KERNEL_OK")
</pallas_src>

<mosaic_0001>
module attributes {stable_mosaic.version = 11 : i64} {
  func.func @_slowdown_kernel(%arg0: i32, %arg1: i32, %arg2: i32, %arg3: memref<1x8x512xf32, #tpu.memory_space<vmem>>, %arg4: memref<1x8x512xf32, #tpu.memory_space<vmem>>) attributes {dimension_semantics = [#tpu.dimension_semantics<parallel>, #tpu.dimension_semantics<parallel>, #tpu.dimension_semantics<parallel>], iteration_bounds = array<i64: 2, 1, 1>, scalar_prefetch = 0 : i64, scratch_operands = 0 : i64, tpu.core_type = #tpu.core_type<tc>, window_params = [{transform_indices = @transform_0, window_bounds = array<i64: 1, 8, 512>}, {transform_indices = @transform_1, window_bounds = array<i64: 1, 8, 512>}]} {
    %c0 = arith.constant 0 : index
    %c0_0 = arith.constant 0 : index
    %c0_1 = arith.constant 0 : index
    %0 = vector.load %arg3[%c0, %c0_0, %c0_1] : memref<1x8x512xf32, #tpu.memory_space<vmem>>, vector<1x1x512xf32>
    %1 = vector.shape_cast %0 : vector<1x1x512xf32> to vector<1x512xf32>
    %2 = vector.shape_cast %1 : vector<1x512xf32> to vector<1x512xf32>
    %3 = vector.broadcast %2 : vector<1x512xf32> to vector<2x512xf32>
    %c0_2 = arith.constant 0 : index
    %c0_3 = arith.constant 0 : index
    %c0_4 = arith.constant 0 : index
    %4 = vector.load %arg4[%c0_2, %c0_3, %c0_4] : memref<1x8x512xf32, #tpu.memory_space<vmem>>, vector<1x2x512xf32>
    %5 = vector.shape_cast %4 : vector<1x2x512xf32> to vector<2x512xf32>
    %6 = vector.shape_cast %3 : vector<2x512xf32> to vector<1x2x512xf32>
    tpu.vector_store %arg4[%c0_2, %c0_3, %c0_4], %6 {strides = array<i32>} : memref<1x8x512xf32, #tpu.memory_space<vmem>>, vector<1x2x512xf32>,
    %c0_5 = arith.constant 0 : index
    %c1 = arith.constant 1 : index
    %c0_6 = arith.constant 0 : index
    %7 = vector.load %arg3[%c0_5, %c1, %c0_6] : memref<1x8x512xf32, #tpu.memory_space<vmem>>, vector<1x1x512xf32>
    %8 = vector.shape_cast %7 : vector<1x1x512xf32> to vector<1x512xf32>
    %9 = vector.shape_cast %8 : vector<1x512xf32> to vector<1x512xf32>
    %10 = vector.broadcast %9 : vector<1x512xf32> to vector<2x512xf32>
    %c0_7 = arith.constant 0 : index
    %c2 = arith.constant 2 : index
    %c0_8 = arith.constant 0 : index
    %11 = vector.load %arg4[%c0_7, %c2, %c0_8] : memref<1x8x512xf32, #tpu.memory_space<vmem>>, vector<1x2x512xf32>
    %12 = vector.shape_cast %11 : vector<1x2x512xf32> to vector<2x512xf32>
    %13 = vector.shape_cast %10 : vector<2x512xf32> to vector<1x2x512xf32>
    tpu.vector_store %arg4[%c0_7, %c2, %c0_8], %13 {strides = array<i32>} : memref<1x8x512xf32, #tpu.memory_space<vmem>>, vector<1x2x512xf32>,
    %c0_9 = arith.constant 0 : index
    %c2_10 = arith.constant 2 : index
    %c0_11 = arith.constant 0 : index
    %14 = vector.load %arg3[%c0_9, %c2_10, %c0_11] : memref<1x8x512xf32, #tpu.memory_space<vmem>>, vector<1x1x512xf32>
    %15 = vector.shape_cast %14 : vector<1x1x512xf32> to vector<1x512xf32>
    %16 = vector.shape_cast %15 : vector<1x512xf32> to vector<1x512xf32>
    %17 = vector.broadcast %16 : vector<1x512xf32> to vector<2x512xf32>
    %c0_12 = arith.constant 0 : index
    %c4 = arith.constant 4 : index
    %c0_13 = arith.constant 0 : index
    %18 = vector.load %arg4[%c0_12, %c4, %c0_13] : memref<1x8x512xf32, #tpu.memory_space<vmem>>, vector<1x2x512xf32>
    %19 = vector.shape_cast %18 : vector<1x2x512xf32> to vector<2x512xf32>
    %20 = vector.shape_cast %17 : vector<2x512xf32> to vector<1x2x512xf32>
    tpu.vector_store %arg4[%c0_12, %c4, %c0_13], %20 {strides = array<i32>} : memref<1x8x512xf32, #tpu.memory_space<vmem>>, vector<1x2x512xf32>,
    %c0_14 = arith.constant 0 : index
    %c3 = arith.constant 3 : index
    %c0_15 = arith.constant 0 : index
    %21 = vector.load %arg3[%c0_14, %c3, %c0_15] : memref<1x8x512xf32, #tpu.memory_space<vmem>>, vector<1x1x512xf32>
    %22 = vector.shape_cast %21 : vector<1x1x512xf32> to vector<1x512xf32>
    %23 = vector.shape_cast %22 : vector<1x512xf32> to vector<1x512xf32>
    %24 = vector.broadcast %23 : vector<1x512xf32> to vector<2x512xf32>
    %c0_16 = arith.constant 0 : index
    %c6 = arith.constant 6 : index
    %c0_17 = arith.constant 0 : index
    %25 = vector.load %arg4[%c0_16, %c6, %c0_17] : memref<1x8x512xf32, #tpu.memory_space<vmem>>, vector<1x2x512xf32>
    %26 = vector.shape_cast %25 : vector<1x2x512xf32> to vector<2x512xf32>
    %27 = vector.shape_cast %24 : vector<2x512xf32> to vector<1x2x512xf32>
    tpu.vector_store %arg4[%c0_16, %c6, %c0_17], %27 {strides = array<i32>} : memref<1x8x512xf32, #tpu.memory_space<vmem>>, vector<1x2x512xf32>,
    return
  }
  func.func @transform_0(%arg0: i32, %arg1: i32, %arg2: i32) -> (i32, i32, i32) {
    %c0_i32 = arith.constant 0 : i32
    return %arg0, %arg1, %arg2 : i32, i32, i32
  }
  func.func @transform_1(%arg0: i32, %arg1: i32, %arg2: i32) -> (i32, i32, i32) {
    %c0_i32 = arith.constant 0 : i32
    return %arg0, %arg1, %arg2 : i32, i32, i32
  }
}

</mosaic_0001>

<llo_original>
// kernel: tpu_custom_call.1
$region0: #{tpu_custom_call.1}
  #allocation0 [shape = 'u32[]', space=smem, size = 0x4, offset = 0x4, fixed_abs, tag = 'smem constant byte address 0x4 - core index']
  #allocation1 [shape = 'u32[144,128]{1,0:T(1,128)}', space=vmem, size = 0x12000, scoped, tag = 'internal scratch']
  %s0 = inlined_call_operand.hbm [shape: f32[2,8,512], index: 0, kind: input, shape index: {}]
  %s1 = inlined_call_operand.hbm [shape: f32[2,8,512], index: 1, kind: output, shape index: {}]
  %s2 = sld [smem:[#allocation0]]
  $region41: #{tpu_custom_call.1} parent=0
    _
  %s4 = ssub.s32 1, %s2
  %s5 = scalar_select 0, %s4, %s2
  $region1: #{tpu_custom_call.1} parent=0
    #allocation2 [shape = 'u8[32768]{0}', space=vmem, size = 0x8000, scoped, tag = 'input window, operand 0']
    #allocation3 [shape = 's32[2]{0}', space=sflag, size = 0x8, scoped, tag = 'scoped memory for tpu_custom_call.1']
    #allocation4 [shape = 's32[2]{0}', space=sflag, size = 0x8, scoped, tag = 'scoped memory for tpu_custom_call.1']
    #allocation5 [shape = 'u8[32768]{0}', space=vmem, size = 0x8000, scoped, tag = 'output window, operand 0']
    %6 = vsyncpa [#allocation3], 0
    %s7 = scalar_lea.sflag [#allocation3], 1
    %8 = vsyncpa %s7, 0
    %9 = vsyncpa [#allocation4], 0
    %s10 = scalar_lea.sflag [#allocation4], 1
    %11 = vsyncpa %s10, 0
    loop: start=0, step=1, limit=4
    $region2: #{tpu_custom_call.1} parent=1 // loop_pre_header
      _
    $region3: #{tpu_custom_call.1} parent=1 // loop_header
      %s13 = sphi 0, %s17
      %p14 = scmp.ge.s32.totalorder %s13, 4
      %s20 = sphi 0, %s39
      %s21 = sphi 0, %s35
      %s22 = sphi 0, %s31
      %s23 = sphi 0, %s20
      %s24 = sphi 0, %s21
      %s25 = sphi 0, %s22
      %s26 = sphi 0, %s23
      %s27 = sphi 0, %s24
      %s28 = sphi 0, %s25
      %s46 = sphi 0, %s48
      %s49 = sphi 0, %s46
      %s50 = sphi 0, %s49
      %s66 = sphi 0, %s50
      %s76 = sphi 0, %s78
      %s79 = sphi 0, %s76
      %s80 = sphi 0, %s79
      %s96 = sphi 0, %s80
    $region4: #{tpu_custom_call.1} parent=1 // loop_header_branch
      %16 = sbr.rel (%p14) target = $region8
    $region5: #{tpu_custom_call.1} parent=1 // loop_body
      %s18 = ssub.s32 %s13, 1
      %s19 = ssub.s32 %s13, 2
      %s29 = sadd.s32 1, %s22
      %p30 = scmp.ge.s32.totalorder %s29, 1
      %s31 = scalar_select %p30, 0, %s29
      %s32 = sadd.s32 1, %s21
      %s33 = scalar_select %p30, %s32, %s21
      %p34 = scmp.ge.s32.totalorder %s33, 1
      %s35 = scalar_select %p34, 0, %s33
      %s36 = sadd.s32 1, %s20
      %s37 = scalar_select %p34, %s36, %s20
      %p38 = scmp.ge.s32.totalorder %s37, 2
      %s39 = scalar_select %p38, 0, %s37
      %s40 = ssub.s32 %s20, %s39
      %s41 = ssub.s32 %s21, %s35
      %s42 = sor.u32 %s40, %s41
      %s43 = ssub.s32 %s22, %s31
      %s44 = sor.u32 %s42, %s43
      %p45 = scmp.eq.s32.totalorder %s44, 0
      %s47 = sadd.s32 %s46, 1
      %s48 = scalar_select %p45, %s46, %s47
      %p51 = pneg %p45
      %p52 = scmp.eq.s32.totalorder %s13, 1
      %p53 = por %p51, %p52
      %p54 = scmp.ne.s32.totalorder %s46, %s49
      %p55 = scmp.eq.s32.totalorder %s13, 0
      %p56 = por %p54, %p55
      %p57 = scmp.ne.s32.totalorder %s46, %s49
      %p58 = scmp.eq.s32.totalorder %s18, 1
      %p59 = por %p57, %p58
      %p60 = scmp.ne.s32.totalorder %s49, %s50
      %p61 = scmp.eq.s32.totalorder %s18, 0
      %p62 = por %p60, %p61
      %p63 = scmp.ne.s32.totalorder %s49, %s50
      %p64 = scmp.eq.s32.totalorder %s19, 1
      %p65 = por %p63, %p64
      %p67 = scmp.ne.s32.totalorder %s50, %s66
      %p68 = scmp.eq.s32.totalorder %s19, 0
      %p69 = por %p67, %p68
      %s70 = ssub.s32 %s20, %s39
      %s71 = ssub.s32 %s21, %s35
      %s72 = sor.u32 %s70, %s71
      %s73 = ssub.s32 %s22, %s31
      %s74 = sor.u32 %s72, %s73
      %p75 = scmp.eq.s32.totalorder %s74, 0
      %s77 = sadd.s32 %s76, 1
      %s78 = scalar_select %p75, %s76, %s77
      %p81 = pneg %p75
      %p82 = scmp.eq.s32.totalorder %s13, 1
      %p83 = por %p81, %p82
      %p84 = scmp.ne.s32.totalorder %s76, %s79
      %p85 = scmp.eq.s32.totalorder %s13, 0
      %p86 = por %p84, %p85
      %p87 = scmp.ne.s32.totalorder %s76, %s79
      %p88 = scmp.eq.s32.totalorder %s18, 1
      %p89 = por %p87, %p88
      %p90 = scmp.ne.s32.totalorder %s79, %s80
      %p91 = scmp.eq.s32.totalorder %s18, 0
      %p92 = por %p90, %p91
      %p93 = scmp.ne.s32.totalorder %s79, %s80
      %p94 = scmp.eq.s32.totalorder %s19, 1
      %p95 = por %p93, %p94
      %p97 = scmp.ne.s32.totalorder %s80, %s96
      %p98 = scmp.eq.s32.totalorder %s19, 0
      %p99 = por %p97, %p98
      %p100 = scmp.le.s32.totalorder 1, %s13
      %p101 = scmp.lt.s32.totalorder %s13, 3
      %p102 = pnand %p100, %p101
      %p103 = pneg %p102
      // Predicated region
      $region9: #{tpu_custom_call.1} parent=5 // pred_check
        _
      $region10: #{tpu_custom_call.1} parent=5 // pred_check_branch
        %105 = sbr.rel (%p102) target = $region12
      $region11: #{tpu_custom_call.1} parent=5 // pred_region
        %s106 = ssub.s32 %s13, 1
      $region12: #{tpu_custom_call.1} parent=5 // pred_fallthru
        _
      %p107 = scmp.lt.s32.totalorder %s13, 2
      // Predicated region
      $region13: #{tpu_custom_call.1} parent=5 // pred_check
        %p108 = pneg %p107
      $region14: #{tpu_custom_call.1} parent=5 // pred_check_branch
        %110 = sbr.rel (%p108) target = $region16
      $region15: #{tpu_custom_call.1} parent=5 // pred_region
        // Predicated region
        $region17: #{tpu_custom_call.1} parent=15 // pred_check
          %p111 = pneg %p56
        $region18: #{tpu_custom_call.1} parent=15 // pred_check_branch
          %113 = sbr.rel (%p111) target = $region20
        $region19: #{tpu_custom_call.1} parent=15 // pred_region
          %s114 = sand.u32 %s46, 1
          %s115 = scalar_lea.sflag [#allocation3], %s114
          %s116 = sand.u32 %s46, 1
          %s117 = smul.addr %s116, 32
          %s118 = scalar_lea.vmem [#allocation2], %s117
          %s119 = smul.u32 4, %s22
          %s121 = ssub.s32 512, 512
          %122 = vsyncadd %s115, %s121
          %s123 = smul.addr %s21, 4
          %s124 = sadd.s32 %s119, %s123
          %s125 = smul.addr %s20, 4
          %s126 = sadd.s32 %s124, %s125
          %s127 = smul.addr %s126, 128
          %s128 = scalar_lea.hbm %s0, %s127
          %s130 = sshll.u32 %s118, 4
          %s131 = int_to_ptr.vmem [resolvable:$true] %s130
          %133 = dma.hbm_to_vmem [thread:$0]  %s128, 512, %s131, %s115
        $region20: #{tpu_custom_call.1} parent=15 // pred_fallthru
          _
      $region16: #{tpu_custom_call.1} parent=5 // pred_fallthru
        _
      %p134 = scmp.le.s32.totalorder 1, %s13
      %p135 = scmp.lt.s32.totalorder %s13, 3
      %p136 = pnand %p134, %p135
      %p137 = pneg %p136
      // Predicated region
      $region21: #{tpu_custom_call.1} parent=5 // pred_check
        _
      $region22: #{tpu_custom_call.1} parent=5 // pred_check_branch
        %139 = sbr.rel (%p136) target = $region24
      $region23: #{tpu_custom_call.1} parent=5 // pred_region
        %s140 = ssub.s32 %s13, 1
        %s141 = sand.u32 %s49, 1
        %s142 = scalar_lea.sflag [#allocation3], %s141
        %s143 = sand.u32 %s49, 1
        %s144 = smul.addr %s143, 32
        %s145 = scalar_lea.vmem [#allocation2], %s144
        // Predicated region
        $region25: #{tpu_custom_call.1} parent=23 // pred_check
          %p146 = pneg %p62
        $region26: #{tpu_custom_call.1} parent=23 // pred_check_branch
          %148 = sbr.rel (%p146) target = $region28
        $region27: #{tpu_custom_call.1} parent=23 // pred_region
          %149 = dma.done %s142, 512
        $region28: #{tpu_custom_call.1} parent=23 // pred_fallthru
          _
        %s150 = sand.u32 %s49, 1
        %s151 = scalar_lea.sflag [#allocation3], %s150
        %s152 = sand.u32 %s49, 1
        %s153 = smul.addr %s152, 32
        %s154 = scalar_lea.vmem [#allocation2], %s153
        %p155 = pneg %p62
        %p156 = pneg %p59
        %p157 = pneg %p92
        %p158 = pneg %p89
        %s159 = sand.u32 %s79, 1
        %s160 = scalar_lea.sflag [#allocation4], %s159
        %s161 = sand.u32 %s79, 1
        %s162 = smul.addr %s161, 32
        %s163 = scalar_lea.vmem [#allocation5], %s162
        %s164 = smul.u32 4, %s25
        %s165 = smul.u32 4, %s25
        %v166 = vld [vmem:[%s145] ss:$8 sm:$0xf]
        %v168 = vlaneseq
        %v169 = vshrl.u32 %v168, 7
        %v170 = vsub.s32 0, %v169
        %v171 = vrot.slane %v166, %v170
        %v172 = vlaneseq
        %v173 = vshrl.u32 %v172, 7
        %v174 = vsub.s32 1, %v173
        %v175 = vrot.slane %v166, %v174
        %v176 = vlaneseq
        %v177 = vshrl.u32 %v176, 7
        %v178 = vsub.s32 2, %v177
        %v179 = vrot.slane %v166, %v178
        %v180 = vlaneseq
        %v181 = vshrl.u32 %v180, 7
        %v182 = vsub.s32 3, %v181
        %v183 = vrot.slane %v166, %v182
        %188 = vst [vmem:[%s163] sm:$0x3] %v171
        %189 = vst [vmem:[%s163 + $0x8] sm:$0x3] %v175
        %190 = vst [vmem:[%s163 + $0x10] sm:$0x3] %v179
        %191 = vst [vmem:[%s163 + $0x18] sm:$0x3] %v183
        %s192 = scalar_lea.vmem %s145, 1 [#allocation2]
        %v193 = vld [vmem:[%s192] ss:$8 sm:$0xf]
        %v195 = vlaneseq
        %v196 = vshrl.u32 %v195, 7
        %v197 = vsub.s32 0, %v196
        %v198 = vrot.slane %v193, %v197
        %v199 = vlaneseq
        %v200 = vshrl.u32 %v199, 7
        %v201 = vsub.s32 1, %v200
        %v202 = vrot.slane %v193, %v201
        %v203 = vlaneseq
        %v204 = vshrl.u32 %v203, 7
        %v205 = vsub.s32 2, %v204
        %v206 = vrot.slane %v193, %v205
        %v207 = vlaneseq
        %v208 = vshrl.u32 %v207, 7
        %v209 = vsub.s32 3, %v208
        %v210 = vrot.slane %v193, %v209
        %215 = vst [vmem:[%s163] sm:$0xc] %v198
        %216 = vst [vmem:[%s163 + $0x8] sm:$0xc] %v202
        %217 = vst [vmem:[%s163 + $0x10] sm:$0xc] %v206
        %218 = vst [vmem:[%s163 + $0x18] sm:$0xc] %v210
        %s219 = scalar_lea.vmem %s145, 2 [#allocation2]
        %v220 = vld [vmem:[%s219] ss:$8 sm:$0xf]
        %v222 = vlaneseq
        %v223 = vshrl.u32 %v222, 7
        %v224 = vsub.s32 0, %v223
        %v225 = vrot.slane %v220, %v224
        %v226 = vlaneseq
        %v227 = vshrl.u32 %v226, 7
        %v228 = vsub.s32 1, %v227
        %v229 = vrot.slane %v220, %v228
        %v230 = vlaneseq
        %v231 = vshrl.u32 %v230, 7
        %v232 = vsub.s32 2, %v231
        %v233 = vrot.slane %v220, %v232
        %v234 = vlaneseq
        %v235 = vshrl.u32 %v234, 7
        %v236 = vsub.s32 3, %v235
        %v237 = vrot.slane %v220, %v236
        %242 = vst [vmem:[%s163] sm:$0x30] %v225
        %243 = vst [vmem:[%s163 + $0x8] sm:$0x30] %v229
        %244 = vst [vmem:[%s163 + $0x10] sm:$0x30] %v233
        %245 = vst [vmem:[%s163 + $0x18] sm:$0x30] %v237
        %s246 = scalar_lea.vmem %s145, 3 [#allocation2]
        %v247 = vld [vmem:[%s246] ss:$8 sm:$0xf]
        %v249 = vlaneseq
        %v250 = vshrl.u32 %v249, 7
        %v251 = vsub.s32 0, %v250
        %v252 = vrot.slane %v247, %v251
        %v253 = vlaneseq
        %v254 = vshrl.u32 %v253, 7
        %v255 = vsub.s32 1, %v254
        %v256 = vrot.slane %v247, %v255
        %v257 = vlaneseq
        %v258 = vshrl.u32 %v257, 7
        %v259 = vsub.s32 2, %v258
        %v260 = vrot.slane %v247, %v259
        %v261 = vlaneseq
        %v262 = vshrl.u32 %v261, 7
        %v263 = vsub.s32 3, %v262
        %v264 = vrot.slane %v247, %v263
        %269 = vst [vmem:[%s163] sm:$0xc0] %v252
        %270 = vst [vmem:[%s163 + $0x8] sm:$0xc0] %v256
        %271 = vst [vmem:[%s163 + $0x10] sm:$0xc0] %v260
        %272 = vst [vmem:[%s163 + $0x18] sm:$0xc0] %v264
        %s273 = sand.u32 %s79, 1
        %s274 = scalar_lea.sflag [#allocation4], %s273
        %s275 = sand.u32 %s79, 1
        %s276 = smul.addr %s275, 32
        %s277 = scalar_lea.vmem [#allocation5], %s276
        // Predicated region
        $region29: #{tpu_custom_call.1} parent=23 // pred_check
          %p278 = pneg %p89
        $region30: #{tpu_custom_call.1} parent=23 // pred_check_branch
          %280 = sbr.rel (%p278) target = $region32
        $region31: #{tpu_custom_call.1} parent=23 // pred_region
          %s281 = smul.u32 4, %s25
          %s283 = ssub.s32 512, 512
          %284 = vsyncadd %s274, %s283
          %s285 = smul.addr %s24, 4
          %s286 = sadd.s32 %s281, %s285
          %s287 = smul.addr %s23, 4
          %s288 = sadd.s32 %s286, %s287
          %s289 = smul.addr %s288, 128
          %s290 = scalar_lea.hbm %s1, %s289
          %s292 = sshll.u32 %s277, 4
          %s293 = int_to_ptr.vmem [resolvable:$true] %s292
          %295 = dma.vmem_to_hbm [thread:$0]  %s293, 512, %s290, %s274
        $region32: #{tpu_custom_call.1} parent=23 // pred_fallthru
          _
      $region24: #{tpu_custom_call.1} parent=5 // pred_fallthru
        _
      %p296 = scmp.le.s32.totalorder 2, %s13
      // Predicated region
      $region33: #{tpu_custom_call.1} parent=5 // pred_check
        %p297 = pneg %p296
      $region34: #{tpu_custom_call.1} parent=5 // pred_check_branch
        %299 = sbr.rel (%p297) target = $region36
      $region35: #{tpu_custom_call.1} parent=5 // pred_region
        %s300 = ssub.s32 %s13, 2
        // Predicated region
        $region37: #{tpu_custom_call.1} parent=35 // pred_check
          %p301 = pneg %p95
        $region38: #{tpu_custom_call.1} parent=35 // pred_check_branch
          %303 = sbr.rel (%p301) target = $region40
        $region39: #{tpu_custom_call.1} parent=35 // pred_region
          %s304 = sand.u32 %s80, 1
          %s305 = scalar_lea.sflag [#allocation4], %s304
          %s306 = sand.u32 %s80, 1
          %s307 = smul.addr %s306, 32
          %s308 = scalar_lea.vmem [#allocation5], %s307
          %309 = dma.done %s305, 512
        $region40: #{tpu_custom_call.1} parent=35 // pred_fallthru
          _
      $region36: #{tpu_custom_call.1} parent=5 // pred_fallthru
        _
    $region6: #{tpu_custom_call.1} parent=1 // loop_footer
      %s17 = sadd.s32 1, %s13
    $region7: #{tpu_custom_call.1} parent=1 // loop_footer_branch
      %12 = sbr.rel target = $region3
    $region8: #{tpu_custom_call.1} parent=1 // loop_exit
      _
    %310 = vsyncpa [#allocation3], 1
    %s311 = scalar_lea.sflag [#allocation3], 1
    %312 = vsyncpa %s311, 1
    %313 = vsyncpa [#allocation4], 1
    %s314 = scalar_lea.sflag [#allocation4], 1
    %315 = vsyncpa %s314, 1

</llo_original>
